<compile_context>
chip_gen: v7x
topology: tpu7x:2x2x1
jax: 0.10.0
libtpu: 0.0.40
codegen_flags: <defaults>
</compile_context>

<pallas_src>
import jax
import jax.numpy as jnp
from jax.experimental import pallas as pl
from jax.experimental.pallas import tpu as pltpu

BN_EPS = 1e-5
W_LANES = 256                     # lane width of the packed weight buffer
_EXTRA_ROWS = 256 + 128 + 128     # rows for W2, W3, W4 (W4 K-padded 64->128)


def _round_up(x, m):
    return (x + m - 1) // m * m


def _make_kernel(in_pad):
    """Kernel closure over the (static) padded input-feature count."""
    o2 = in_pad              # row offsets of each weight block inside wpack
    o3 = in_pad + 256
    o4 = in_pad + 384

    def kernel(x_ref, w_ref, b_ref, o_ref):
        h = x_ref[...]                                      # (tile_b, in_pad) bf16

        # Linear1 (+ folded BN1) -> ReLU
        h = jnp.dot(h, w_ref[0:in_pad, 0:256],
                    preferred_element_type=jnp.float32) + b_ref[0:1, 0:256]
        h = jnp.maximum(h, 0.0).astype(jnp.bfloat16)        # (tile_b, 256)

        # Linear2 (+ folded BN2) -> ReLU
        h = jnp.dot(h, w_ref[o2:o2 + 256, 0:128],
                    preferred_element_type=jnp.float32) + b_ref[1:2, 0:128]
        h = jnp.maximum(h, 0.0).astype(jnp.bfloat16)        # (tile_b, 128)

        # Linear3 (+ folded BN3) -> ReLU.  N padded 64->128 lanes (zero cols).
        h = jnp.dot(h, w_ref[o3:o3 + 128, 0:128],
                    preferred_element_type=jnp.float32) + b_ref[2:3, 0:128]
        h = jnp.maximum(h, 0.0).astype(jnp.bfloat16)        # cols 64: stay zero

        # Linear4 -> ReLU.  K padded 64->128 rows, N padded 32->128 lanes.
        h = jnp.dot(h, w_ref[o4:o4 + 128, 0:128],
                    preferred_element_type=jnp.float32) + b_ref[3:4, 0:128]
        h = jnp.maximum(h, 0.0)                             # (tile_b, 128) f32, cols 32: zero

        # Head Linear(32,1): VPU multiply + XLU lane-reduce (no N=1 MXU pass),
        # written lane-dense as a (1, tile_b) row -> unmasked stores.
        w5_row = b_ref[5:6, 0:128]                          # zeros beyond lane 31
        y = jnp.sum(h * w5_row, axis=-1)                    # (tile_b,)
        o_ref[...] = y[None, :] + b_ref[4:5, 0:1]           # + head bias

    return kernel


def _pick_tile_b(B):
    """Large batch tiles amortize the ~0.35us per-grid-step overhead; prefer
    tiles that divide B (no host batch-pad copy) and keep >= 2 tiles for v7x
    megacore.  Small B: one tile rounded to the bf16 sublane tile (16)."""
    if B <= 512:
        return _round_up(max(B, 1), 16)
    for cand in (2048, 1024, 512, 256):
        if B % cand == 0 and B // cand >= 2:
            return cand
    half = _round_up((B + 1) // 2, 16)
    if half <= 2048:
        return half
    return 512    # fallback: only the tail tile gets padded


@jax.jit
def mlp_forward(x, wpack, bpack):
    """x: (B, input_size) f32.  wpack/bpack from pack_params()."""
    B, F = x.shape
    in_pad = wpack.shape[0] - _EXTRA_ROWS
    assert F <= in_pad, "input feature count exceeds the packed weight width"

    tile_b = _pick_tile_b(B)
    bp = _round_up(B, tile_b)
    n_tiles = bp // tile_b

    # Single fused pass under jit: batch/feature zero-pad + f32 -> bf16 cast.
    pad_rows, pad_cols = bp - B, in_pad - F
    if pad_rows or pad_cols:
        xb = jnp.pad(x, ((0, pad_rows), (0, pad_cols))).astype(jnp.bfloat16)
    else:
        xb = x.astype(jnp.bfloat16)

    # VMEM budget: double-buffered x tiles + resident packs + activation slack.
    # Only raise the scoped limit when the conservative default could be too
    # small (cap at v7x's 64 MiB physical VMEM).
    vmem_need = (wpack.size * 2 + bpack.size * 4
                 + 2 * tile_b * in_pad * 2
                 + 2 * tile_b * 4
                 + tile_b * 640 * 4 * 2)
    cp = dict(dimension_semantics=("parallel",))
    if vmem_need > (16 << 20):
        cp["vmem_limit_bytes"] = int(min(2 * vmem_need, 64 << 20))

    out = pl.pallas_call(
        _make_kernel(in_pad),
        out_shape=jax.ShapeDtypeStruct((n_tiles, tile_b), jnp.float32),
        grid=(n_tiles,),
        in_specs=[
            pl.BlockSpec((tile_b, in_pad), lambda i: (i, 0)),   # streamed bf16 x tiles
            pl.BlockSpec(wpack.shape, lambda i: (0, 0)),        # resident packed weights
            pl.BlockSpec(bpack.shape, lambda i: (0, 0)),        # resident biases / head row
        ],
        out_specs=pl.BlockSpec((1, tile_b), lambda i: (i, 0)),  # lane-dense output rows
        compiler_params=pltpu.CompilerParams(**cp),
    )(xb, wpack, bpack)

    return out.reshape(-1)[:B].reshape(B, 1)


def init_params(key, input_size):
    """Raw PyTorch-style parameters.  Linear: U(-1/sqrt(fan_in), +bound).
    BN stats/affine are randomized (as after training) so the host-side fold is
    actually exercised by the correctness check."""
    dims = [input_size, 256, 128, 64, 32, 1]
    bn_layers = {0, 1, 2}
    params = []
    for i in range(5):
        fan_in, fan_out = dims[i], dims[i + 1]
        key, kw, kb, k1, k2, k3, k4 = jax.random.split(key, 7)
        bound = float(fan_in) ** -0.5
        w = jax.random.uniform(kw, (fan_in, fan_out), jnp.float32, -bound, bound)
        b = jax.random.uniform(kb, (fan_out,), jnp.float32, -bound, bound)
        params.extend([w, b])
        if i in bn_layers:
            gamma = jax.random.uniform(k1, (fan_out,), jnp.float32, 0.8, 1.2)
            beta = 0.1 * jax.random.normal(k2, (fan_out,), jnp.float32)
            run_mean = 0.1 * jax.random.normal(k3, (fan_out,), jnp.float32)
            run_var = jax.random.uniform(k4, (fan_out,), jnp.float32, 0.5, 1.5)
            params.extend([gamma, beta, run_mean, run_var])
    return tuple(params)


def pack_params(raw, input_size):
    """Fold eval-mode BN into the preceding Linears, lane-pad layers 3/4, and
    pack everything into one bf16 weight buffer + one f32 bias/head buffer."""
    (w1, b1, g1, be1, rm1, rv1,
     w2, b2, g2, be2, rm2, rv2,
     w3, b3, g3, be3, rm3, rv3,
     w4, b4, w5, b5) = raw

    def fold(w, b, g, be, rm, rv):
        s = g * jax.lax.rsqrt(rv + BN_EPS)
        return w * s[None, :], (b - rm) * s + be

    w1f, b1f = fold(w1, b1, g1, be1, rm1, rv1)
    w2f, b2f = fold(w2, b2, g2, be2, rm2, rv2)
    w3f, b3f = fold(w3, b3, g3, be3, rm3, rv3)

    in_pad = _round_up(input_size, 16)        # bf16 sublane-tile alignment
    rows = in_pad + _EXTRA_ROWS
    wpack = jnp.zeros((rows, W_LANES), jnp.float32)
    wpack = wpack.at[0:input_size, 0:256].set(w1f)
    wpack = wpack.at[in_pad:in_pad + 256, 0:128].set(w2f)
    wpack = wpack.at[in_pad + 256:in_pad + 384, 0:64].set(w3f)   # N zero-padded to 128
    wpack = wpack.at[in_pad + 384:in_pad + 448, 0:32].set(w4)    # K/N zero-padded to 128
    wpack = wpack.astype(jnp.bfloat16)

    bpack = jnp.zeros((8, W_LANES), jnp.float32)
    bpack = bpack.at[0, 0:256].set(b1f)
    bpack = bpack.at[1, 0:128].set(b2f)
    bpack = bpack.at[2, 0:64].set(b3f)          # lanes 64: stay zero
    bpack = bpack.at[3, 0:32].set(b4)           # lanes 32: stay zero
    bpack = bpack.at[4, 0].set(b5[0])           # head bias (scalar)
    bpack = bpack.at[5, 0:32].set(w5[:, 0])     # head weight as a lane row
    return wpack, bpack


def mlp_forward_ref(x, raw):
    """Pure-JAX f32 reference with the original (unfolded) PyTorch semantics."""
    (w1, b1, g1, be1, rm1, rv1,
     w2, b2, g2, be2, rm2, rv2,
     w3, b3, g3, be3, rm3, rv3,
     w4, b4, w5, b5) = raw

    def bn(h, g, be, rm, rv):
        return (h - rm) * jax.lax.rsqrt(rv + BN_EPS) * g + be

    h = jnp.maximum(bn(x @ w1 + b1, g1, be1, rm1, rv1), 0.0)
    h = jnp.maximum(bn(h @ w2 + b2, g2, be2, rm2, rv2), 0.0)
    h = jnp.maximum(bn(h @ w3 + b3, g3, be3, rm3, rv3), 0.0)
    h = jnp.maximum(h @ w4 + b4, 0.0)
    return h @ w5 + b5


if __name__ == "__main__":
    key = jax.random.PRNGKey(0)
    batch, input_size = 8, 32

    key, kx = jax.random.split(key)
    x = jax.random.normal(kx, (batch, input_size), jnp.float32)
    raw_params = init_params(key, input_size)
    wpack, bpack = pack_params(raw_params, input_size)

    out = mlp_forward(x, wpack, bpack)
    jax.block_until_ready(out)

    ref = mlp_forward_ref(x, raw_params)
    assert out.shape == (batch, 1)
    # bf16 MXU operands + BN fold -> small numerical drift vs the pure-f32 reference.
    assert jnp.allclose(out, ref, atol=5e-2, rtol=5e-2), \
        "Pallas output mismatch vs JAX reference"

    print("KERNEL_OK")
</pallas_src>

<mosaic_0001>
module attributes {stable_mosaic.version = 11 : i64} {
  func.func @kernel(%arg0: i32, %arg1: memref<16x32xbf16, #tpu.memory_space<vmem>>, %arg2: memref<544x256xbf16, #tpu.memory_space<vmem>>, %arg3: memref<8x256xf32, #tpu.memory_space<vmem>>, %arg4: memref<1x16xf32, #tpu.memory_space<vmem>>) attributes {dimension_semantics = [#tpu.dimension_semantics<parallel>], iteration_bounds = array<i64: 1>, scalar_prefetch = 0 : i64, scratch_operands = 0 : i64, tpu.core_type = #tpu.core_type<tc>, window_params = [{transform_indices = @transform_0, window_bounds = array<i64: 16, 32>}, {pipeline_mode = #tpu.pipeline_mode<synchronous>, transform_indices = @transform_1, window_bounds = array<i64: 544, 256>}, {pipeline_mode = #tpu.pipeline_mode<synchronous>, transform_indices = @transform_2, window_bounds = array<i64: 8, 256>}, {transform_indices = @transform_3, window_bounds = array<i64: 1, 16>}]} {
    %c0 = arith.constant 0 : index
    %c0_0 = arith.constant 0 : index
    %0 = vector.load %arg1[%c0, %c0_0] : memref<16x32xbf16, #tpu.memory_space<vmem>>, vector<16x32xbf16>
    %c0_1 = arith.constant 0 : index
    %c0_2 = arith.constant 0 : index
    %1 = vector.load %arg2[%c0_1, %c0_2] : memref<544x256xbf16, #tpu.memory_space<vmem>>, vector<32x256xbf16>
    %cst = arith.constant dense<0.000000e+00> : vector<16x256xf32>
    %2 = tpu.matmul %0, %1, %cst {dimension_numbers = #tpu.dot_dimension_numbers<[1], [0], [0], [1], [0, 0, 1, 1], [], []>} : vector<16x32xbf16>, vector<32x256xbf16>, vector<16x256xf32> -> vector<16x256xf32>
    %c0_3 = arith.constant 0 : index
    %c0_4 = arith.constant 0 : index
    %3 = vector.load %arg3[%c0_3, %c0_4] : memref<8x256xf32, #tpu.memory_space<vmem>>, vector<1x256xf32>
    %4 = vector.broadcast %3 : vector<1x256xf32> to vector<16x256xf32>
    %5 = arith.addf %2, %4 : vector<16x256xf32>
    %cst_5 = arith.constant 0.000000e+00 : f32
    %6 = vector.broadcast %cst_5 : f32 to vector<16x256xf32>
    %7 = arith.maximumf %5, %6 : vector<16x256xf32>
    %8 = arith.truncf %7 : vector<16x256xf32> to vector<16x256xbf16>
    %c32 = arith.constant 32 : index
    %c0_6 = arith.constant 0 : index
    %9 = vector.load %arg2[%c32, %c0_6] : memref<544x256xbf16, #tpu.memory_space<vmem>>, vector<256x128xbf16>
    %cst_7 = arith.constant dense<0.000000e+00> : vector<16x128xf32>
    %10 = tpu.matmul %8, %9, %cst_7 {dimension_numbers = #tpu.dot_dimension_numbers<[1], [0], [0], [1], [0, 0, 1, 1], [], []>} : vector<16x256xbf16>, vector<256x128xbf16>, vector<16x128xf32> -> vector<16x128xf32>
    %c1 = arith.constant 1 : index
    %c0_8 = arith.constant 0 : index
    %11 = vector.load %arg3[%c1, %c0_8] : memref<8x256xf32, #tpu.memory_space<vmem>>, vector<1x128xf32>
    %12 = vector.broadcast %11 : vector<1x128xf32> to vector<16x128xf32>
    %13 = arith.addf %10, %12 : vector<16x128xf32>
    %cst_9 = arith.constant 0.000000e+00 : f32
    %14 = vector.broadcast %cst_9 : f32 to vector<16x128xf32>
    %15 = arith.maximumf %13, %14 : vector<16x128xf32>
    %16 = arith.truncf %15 : vector<16x128xf32> to vector<16x128xbf16>
    %c288 = arith.constant 288 : index
    %c0_10 = arith.constant 0 : index
    %17 = vector.load %arg2[%c288, %c0_10] : memref<544x256xbf16, #tpu.memory_space<vmem>>, vector<128x128xbf16>
    %cst_11 = arith.constant dense<0.000000e+00> : vector<16x128xf32>
    %18 = tpu.matmul %16, %17, %cst_11 {dimension_numbers = #tpu.dot_dimension_numbers<[1], [0], [0], [1], [0, 0, 1, 1], [], []>} : vector<16x128xbf16>, vector<128x128xbf16>, vector<16x128xf32> -> vector<16x128xf32>
    %c2 = arith.constant 2 : index
    %c0_12 = arith.constant 0 : index
    %19 = vector.load %arg3[%c2, %c0_12] : memref<8x256xf32, #tpu.memory_space<vmem>>, vector<1x128xf32>
    %20 = vector.broadcast %19 : vector<1x128xf32> to vector<16x128xf32>
    %21 = arith.addf %18, %20 : vector<16x128xf32>
    %cst_13 = arith.constant 0.000000e+00 : f32
    %22 = vector.broadcast %cst_13 : f32 to vector<16x128xf32>
    %23 = arith.maximumf %21, %22 : vector<16x128xf32>
    %24 = arith.truncf %23 : vector<16x128xf32> to vector<16x128xbf16>
    %c416 = arith.constant 416 : index
    %c0_14 = arith.constant 0 : index
    %25 = vector.load %arg2[%c416, %c0_14] : memref<544x256xbf16, #tpu.memory_space<vmem>>, vector<128x128xbf16>
    %cst_15 = arith.constant dense<0.000000e+00> : vector<16x128xf32>
    %26 = tpu.matmul %24, %25, %cst_15 {dimension_numbers = #tpu.dot_dimension_numbers<[1], [0], [0], [1], [0, 0, 1, 1], [], []>} : vector<16x128xbf16>, vector<128x128xbf16>, vector<16x128xf32> -> vector<16x128xf32>
    %c3 = arith.constant 3 : index
    %c0_16 = arith.constant 0 : index
    %27 = vector.load %arg3[%c3, %c0_16] : memref<8x256xf32, #tpu.memory_space<vmem>>, vector<1x128xf32>
    %28 = vector.broadcast %27 : vector<1x128xf32> to vector<16x128xf32>
    %29 = arith.addf %26, %28 : vector<16x128xf32>
    %cst_17 = arith.constant 0.000000e+00 : f32
    %30 = vector.broadcast %cst_17 : f32 to vector<16x128xf32>
    %31 = arith.maximumf %29, %30 : vector<16x128xf32>
    %c5 = arith.constant 5 : index
    %c0_18 = arith.constant 0 : index
    %32 = vector.load %arg3[%c5, %c0_18] : memref<8x256xf32, #tpu.memory_space<vmem>>, vector<1x128xf32>
    %33 = vector.broadcast %32 : vector<1x128xf32> to vector<16x128xf32>
    %34 = arith.mulf %31, %33 : vector<16x128xf32>
    %cst_19 = arith.constant dense<0.000000e+00> : vector<16xf32>
    %35 = vector.multi_reduction <add>, %34, %cst_19 [1] : vector<16x128xf32> to vector<16xf32>
    %36 = vector.shape_cast %35 : vector<16xf32> to vector<1x16xf32>
    %c4 = arith.constant 4 : index
    %c0_20 = arith.constant 0 : index
    %37 = vector.load %arg3[%c4, %c0_20] : memref<8x256xf32, #tpu.memory_space<vmem>>, vector<1x1xf32>
    %38 = vector.broadcast %37 : vector<1x1xf32> to vector<1x16xf32>
    %39 = arith.addf %36, %38 : vector<1x16xf32>
    %c0_21 = arith.constant 0 : index
    %c0_22 = arith.constant 0 : index
    %40 = vector.load %arg4[%c0_21, %c0_22] : memref<1x16xf32, #tpu.memory_space<vmem>>, vector<1x16xf32>
    tpu.vector_store %arg4[%c0_21, %c0_22], %39 {strides = array<i32>} : memref<1x16xf32, #tpu.memory_space<vmem>>, vector<1x16xf32>,
    return
  }
  func.func @transform_0(%arg0: i32) -> (i32, i32) {
    %c0_i32 = arith.constant 0 : i32
    %c0_i32_0 = arith.constant 0 : i32
    return %arg0, %c0_i32 : i32, i32
  }
  func.func @transform_1(%arg0: i32) -> (i32, i32) {
    %c0_i32 = arith.constant 0 : i32
    %c0_i32_0 = arith.constant 0 : i32
    %c0_i32_1 = arith.constant 0 : i32
    return %c0_i32, %c0_i32_0 : i32, i32
  }
  func.func @transform_2(%arg0: i32) -> (i32, i32) {
    %c0_i32 = arith.constant 0 : i32
    %c0_i32_0 = arith.constant 0 : i32
    %c0_i32_1 = arith.constant 0 : i32
    return %c0_i32, %c0_i32_0 : i32, i32
  }
  func.func @transform_3(%arg0: i32) -> (i32, i32) {
    %c0_i32 = arith.constant 0 : i32
    %c0_i32_0 = arith.constant 0 : i32
    return %arg0, %c0_i32 : i32, i32
  }
}

</mosaic_0001>

<llo_original>
// kernel: mlp_forward.1
$region0: #{mlp_forward.1}
  #allocation0 [shape = 'u32[]', space=smem, size = 0x4, offset = 0x4, fixed_abs, tag = 'smem constant byte address 0x4 - core index']
  #allocation1 [shape = 'u32[144,128]{1,0:T(1,128)}', space=vmem, size = 0x12000, scoped, tag = 'internal scratch']
  %s0 = inlined_call_operand.vmem [shape: bf16[16,32], index: 0, kind: input, shape index: {}]
  %s1 = inlined_call_operand.hbm [shape: bf16[544,256], index: 1, kind: input, shape index: {}]
  %s2 = inlined_call_operand.vmem [shape: f32[8,256], index: 2, kind: input, shape index: {}]
  %s3 = inlined_call_operand.vmem [shape: f32[1,16], index: 3, kind: output, shape index: {}]
  %s4 = sld [smem:[#allocation0]]
  $region26: #{mlp_forward.1} parent=0
    _
  %s6 = ssub.s32 1, %s4
  %s7 = scalar_select 0, %s6, %s4
  $region1: #{mlp_forward.1} parent=0
    #allocation2 [shape = 'u8[278528]{0}', space=vmem, size = 0x44000, scoped, tag = 'input window, operand 1, single buffered']
    #allocation3 [shape = 's32[1]{0}', space=sflag, size = 0x4, scoped, tag = 'scoped memory for mlp_forward.1']
    %8 = vsyncpa [#allocation3], 0
    // Predicated region
    $region2: #{mlp_forward.1} parent=1 // pred_check
      _
    $region3: #{mlp_forward.1} parent=1 // pred_check_branch
      %10 = sbr.rel (0) target = $region5
    $region4: #{mlp_forward.1} parent=1 // pred_region
      _
    $region5: #{mlp_forward.1} parent=1 // pred_fallthru
      _
    // Predicated region
    $region6: #{mlp_forward.1} parent=1 // pred_check
      _
    $region7: #{mlp_forward.1} parent=1 // pred_check_branch
      %12 = sbr.rel (0) target = $region9
    $region8: #{mlp_forward.1} parent=1 // pred_region
      %s14 = ssub.s32 8704, 8704
      %15 = vsyncadd [#allocation3], %s14
      %s16 = sshll.u32 [#allocation2], 4
      %s17 = int_to_ptr.vmem [resolvable:$true] %s16
      %22 = dma.hbm_to_vmem [thread:$0]  %s1, 8704, %s17, [#allocation3], 128, 128, 8
    $region9: #{mlp_forward.1} parent=1 // pred_fallthru
      _
    // Predicated region
    $region10: #{mlp_forward.1} parent=1 // pred_check
      _
    $region11: #{mlp_forward.1} parent=1 // pred_check_branch
      %24 = sbr.rel (0) target = $region13
    $region12: #{mlp_forward.1} parent=1 // pred_region
      _
    $region13: #{mlp_forward.1} parent=1 // pred_fallthru
      _
    // Predicated region
    $region14: #{mlp_forward.1} parent=1 // pred_check
      _
    $region15: #{mlp_forward.1} parent=1 // pred_check_branch
      %26 = sbr.rel (0) target = $region17
    $region16: #{mlp_forward.1} parent=1 // pred_region
      %27 = dma.done [#allocation3], 8704
    $region17: #{mlp_forward.1} parent=1 // pred_fallthru
      _
    %v29 = vld [vmem:[%s0] sm:$0xf]
    %v30 = vld [vmem:[%s0 + $0x4] sm:$0xf]
    %v31 = vld [vmem:[#allocation2] sm:$0xff]
    %v32 = vld [vmem:[#allocation2 + $0x8] sm:$0xff]
    %v33 = vld [vmem:[#allocation2 + $0x10] sm:$0xff]
    %v34 = vld [vmem:[#allocation2 + $0x18] sm:$0xff]
    %v35 = vld [vmem:[%s2] ss:$8 sm:$0x3]
    %v37 = vlaneseq
    %v38 = vshrl.u32 %v37, 7
    %v39 = vsub.s32 0, %v38
    %v40 = vrot.slane %v35, %v39
    %v41 = vlaneseq
    %v42 = vshrl.u32 %v41, 7
    %v43 = vsub.s32 1, %v42
    %v44 = vrot.slane %v35, %v43
    %v49 = vunpack.c.l.b16 %v29
    %v50 = vunpack.c.l.b16 %v30
    %v51 = vpack.c.b16 %v50, %v49
    %v56 = vunpack.c.l.b16 %v31
    %v57 = vunpack.c.h.b16 %v31
    %v58 = vunpack.c.l.b16 %v32
    %v59 = vunpack.c.h.b16 %v32
    %v60 = vunpack.c.l.b16 %v33
    %v61 = vunpack.c.h.b16 %v33
    %v62 = vunpack.c.l.b16 %v34
    %v63 = vunpack.c.h.b16 %v34
    %v64 = vpack.c.b16 %v58, %v56
    %v65 = vpack.c.b16 %v59, %v57
    %v66 = vpack.c.b16 %v62, %v60
    %v67 = vpack.c.b16 %v63, %v61
    %vm72 = vcmask 261120
    %v74 = vsel %vm72, %v51, 0
    %76 = vmatprep.subr.bf16.mxu0 %v65
    %77 = vmatpush1.bf16.msra.mxu0 %v64
    %78 = vmatprep.subr.bf16.mxu0 %v67
    %79 = vmatpush1.bf16.msra.mxu0 %v66
    %80 = vmatprep.subr.bf16.mxu0 0
    %81 = vmatpush1.bf16.msra.mxu0 0
    %82 = vmatprep.subr.bf16.mxu0 0
    %83 = vmatpush1.bf16.msra.mxu0 0
    %84 = vmatprep.subr.bf16.mxu0 0
    %85 = vmatpush1.bf16.msra.mxu0 0
    %86 = vmatprep.subr.bf16.mxu0 0
    %87 = vmatpush1.bf16.msra.mxu0 0
    %88 = vmatprep.subr.bf16.mxu0 0
    %89 = vmatpush1.bf16.msra.mxu0 0
    %90 = vmatprep.subr.bf16.mxu0 0
    %91 = vmatpush1.bf16.msra.mxu0 0
    %92 = vmatprep.subr.bf16.mxu0 0
    %93 = vmatpush1.bf16.msra.mxu0 0
    %94 = vmatprep.subr.bf16.mxu0 0
    %95 = vmatpush1.bf16.msra.mxu0 0
    %96 = vmatprep.subr.bf16.mxu0 0
    %97 = vmatpush1.bf16.msra.mxu0 0
    %98 = vmatprep.subr.bf16.mxu0 0
    %99 = vmatpush1.bf16.msra.mxu0 0
    %100 = vmatprep.subr.bf16.mxu0 0
    %101 = vmatpush1.bf16.msra.mxu0 0
    %102 = vmatprep.subr.bf16.mxu0 0
    %103 = vmatpush1.bf16.msra.mxu0 0
    %104 = vmatprep.subr.bf16.mxu0 0
    %105 = vmatpush1.bf16.msra.mxu0 0
    %106 = vmatprep.subr.bf16.mxu0 0
    %107 = vmatpush1.bf16.msra.mxu0 0
    %108 = vmatprep.mubr.bf16.mxu0 0
    %109 = vmatmul.mubr.bf16.gmra.mrb[0].mxu0 %v74
    %v110 = vpop.f32.mrb[0].mxu0
    %v111 = vadd.f32 %v40, %v110
    %v112 = vpop.f32.mrb[0].mxu0
    %v113 = vadd.f32 %v44, %v112
    %v114 = vpop.f32.mrb[0].mxu0
    %v115 = vadd.f32 %v40, %v114
    %v116 = vpop.f32.mrb[0].mxu0
    %v117 = vadd.f32 %v44, %v116
    %118 = vdwg.mxu0
    %v119 = vmax.f32 %v111, 0.0
    %v120 = vmax.f32 %v113, 0.0
    %v121 = vmax.f32 %v115, 0.0
    %v122 = vmax.f32 %v117, 0.0
    %v123 = vpack.c.bf16 %v121, %v119
    %v124 = vpack.c.bf16 %v122, %v120
    %v125 = vld [vmem:[#allocation2 + $0x20] sm:$0xf]
    %v126 = vld [vmem:[#allocation2 + $0x28] sm:$0xf]
    %v127 = vld [vmem:[#allocation2 + $0x30] sm:$0xf]
    %v128 = vld [vmem:[#allocation2 + $0x38] sm:$0xf]
    %v129 = vld [vmem:[#allocation2 + $0x40] sm:$0xf]
    %v130 = vld [vmem:[#allocation2 + $0x48] sm:$0xf]
    %v131 = vld [vmem:[#allocation2 + $0x50] sm:$0xf]
    %v132 = vld [vmem:[#allocation2 + $0x58] sm:$0xf]
    %v133 = vld [vmem:[#allocation2 + $0x60] sm:$0xf]
    %v134 = vld [vmem:[#allocation2 + $0x68] sm:$0xf]
    %v135 = vld [vmem:[#allocation2 + $0x70] sm:$0xf]
    %v136 = vld [vmem:[#allocation2 + $0x78] sm:$0xf]
    %v137 = vld [vmem:[#allocation2 + $0x80] sm:$0xf]
    %v138 = vld [vmem:[#allocation2 + $0x88] sm:$0xf]
    %v139 = vld [vmem:[#allocation2 + $0x90] sm:$0xf]
    %v140 = vld [vmem:[#allocation2 + $0x98] sm:$0xf]
    %v141 = vld [vmem:[#allocation2 + $0xa0] sm:$0xf]
    %v142 = vld [vmem:[#allocation2 + $0xa8] sm:$0xf]
    %v143 = vld [vmem:[#allocation2 + $0xb0] sm:$0xf]
    %v144 = vld [vmem:[#allocation2 + $0xb8] sm:$0xf]
    %v145 = vld [vmem:[#allocation2 + $0xc0] sm:$0xf]
    %v146 = vld [vmem:[#allocation2 + $0xc8] sm:$0xf]
    %v147 = vld [vmem:[#allocation2 + $0xd0] sm:$0xf]
    %v148 = vld [vmem:[#allocation2 + $0xd8] sm:$0xf]
    %v149 = vld [vmem:[#allocation2 + $0xe0] sm:$0xf]
    %v150 = vld [vmem:[#allocation2 + $0xe8] sm:$0xf]
    %v151 = vld [vmem:[#allocation2 + $0xf0] sm:$0xf]
    %v152 = vld [vmem:[#allocation2 + $0xf8] sm:$0xf]
    %v153 = vld [vmem:[#allocation2 + $0x100] sm:$0xf]
    %v154 = vld [vmem:[#allocation2 + $0x108] sm:$0xf]
    %v155 = vld [vmem:[#allocation2 + $0x110] sm:$0xf]
    %v156 = vld [vmem:[#allocation2 + $0x118] sm:$0xf]
    %v157 = vld [vmem:[%s2 + $0x1] ss:$0 sm:$0xff]
    %v190 = vunpack.c.l.b16 %v125
    %v191 = vunpack.c.l.b16 %v126
    %v192 = vunpack.c.l.b16 %v127
    %v193 = vunpack.c.l.b16 %v128
    %v194 = vunpack.c.l.b16 %v129
    %v195 = vunpack.c.l.b16 %v130
    %v196 = vunpack.c.l.b16 %v131
    %v197 = vunpack.c.l.b16 %v132
    %v198 = vunpack.c.l.b16 %v133
    %v199 = vunpack.c.l.b16 %v134
    %v200 = vunpack.c.l.b16 %v135
    %v201 = vunpack.c.l.b16 %v136
    %v202 = vunpack.c.l.b16 %v137
    %v203 = vunpack.c.l.b16 %v138
    %v204 = vunpack.c.l.b16 %v139
    %v205 = vunpack.c.l.b16 %v140
    %v206 = vunpack.c.l.b16 %v141
    %v207 = vunpack.c.l.b16 %v142
    %v208 = vunpack.c.l.b16 %v143
    %v209 = vunpack.c.l.b16 %v144
    %v210 = vunpack.c.l.b16 %v145
    %v211 = vunpack.c.l.b16 %v146
    %v212 = vunpack.c.l.b16 %v147
    %v213 = vunpack.c.l.b16 %v148
    %v214 = vunpack.c.l.b16 %v149
    %v215 = vunpack.c.l.b16 %v150
    %v216 = vunpack.c.l.b16 %v151
    %v217 = vunpack.c.l.b16 %v152
    %v218 = vunpack.c.l.b16 %v153
    %v219 = vunpack.c.l.b16 %v154
    %v220 = vunpack.c.l.b16 %v155
    %v221 = vunpack.c.l.b16 %v156
    %v222 = vpack.c.b16 %v191, %v190
    %v223 = vpack.c.b16 %v193, %v192
    %v224 = vpack.c.b16 %v195, %v194
    %v225 = vpack.c.b16 %v197, %v196
    %v226 = vpack.c.b16 %v199, %v198
    %v227 = vpack.c.b16 %v201, %v200
    %v228 = vpack.c.b16 %v203, %v202
    %v229 = vpack.c.b16 %v205, %v204
    %v230 = vpack.c.b16 %v207, %v206
    %v231 = vpack.c.b16 %v209, %v208
    %v232 = vpack.c.b16 %v211, %v210
    %v233 = vpack.c.b16 %v213, %v212
    %v234 = vpack.c.b16 %v215, %v214
    %v235 = vpack.c.b16 %v217, %v216
    %v236 = vpack.c.b16 %v219, %v218
    %v237 = vpack.c.b16 %v221, %v220
    %254 = vmatprep.subr.bf16.mxu0 0
    %255 = vmatpush1.bf16.msra.mxu0 %v222
    %256 = vmatprep.subr.bf16.mxu0 0
    %257 = vmatpush1.bf16.msra.mxu0 %v223
    %258 = vmatprep.subr.bf16.mxu0 0
    %259 = vmatpush1.bf16.msra.mxu0 %v224
    %260 = vmatprep.subr.bf16.mxu0 0
    %261 = vmatpush1.bf16.msra.mxu0 %v225
    %262 = vmatprep.subr.bf16.mxu0 0
    %263 = vmatpush1.bf16.msra.mxu0 %v226
    %264 = vmatprep.subr.bf16.mxu0 0
    %265 = vmatpush1.bf16.msra.mxu0 %v227
    %266 = vmatprep.subr.bf16.mxu0 0
    %267 = vmatpush1.bf16.msra.mxu0 %v228
    %268 = vmatprep.subr.bf16.mxu0 0
    %269 = vmatpush1.bf16.msra.mxu0 %v229
    %270 = vmatprep.subr.bf16.mxu0 0
    %271 = vmatpush1.bf16.msra.mxu0 %v230
    %272 = vmatprep.subr.bf16.mxu0 0
    %273 = vmatpush1.bf16.msra.mxu0 %v231
    %274 = vmatprep.subr.bf16.mxu0 0
    %275 = vmatpush1.bf16.msra.mxu0 %v232
    %276 = vmatprep.subr.bf16.mxu0 0
    %277 = vmatpush1.bf16.msra.mxu0 %v233
    %278 = vmatprep.subr.bf16.mxu0 0
    %279 = vmatpush1.bf16.msra.mxu0 %v234
    %280 = vmatprep.subr.bf16.mxu0 0
    %281 = vmatpush1.bf16.msra.mxu0 %v235
    %282 = vmatprep.subr.bf16.mxu0 0
    %283 = vmatpush1.bf16.msra.mxu0 %v236
    %284 = vmatprep.subr.bf16.mxu0 0
    %285 = vmatpush1.bf16.msra.mxu0 %v237
    %286 = vmatprep.mubr.bf16.mxu0 %v124
    %287 = vmatmul.mubr.bf16.gmra.mrb[0].mxu0 %v123
    %v288 = vpop.f32.mrb[0].mxu0
    %v289 = vadd.f32 %v157, %v288
    %v290 = vpop.f32.mrb[0].mxu0
    %v291 = vpop.f32.mrb[0].mxu0
    %v292 = vadd.f32 %v157, %v291
    %v293 = vpop.f32.mrb[0].mxu0
    %294 = vdwg.mxu0
    %v295 = vmax.f32 %v289, 0.0
    %v296 = vmax.f32 %v292, 0.0
    %v297 = vpack.c.bf16 %v296, %v295
    %v298 = vld [vmem:[#allocation2 + $0x120] sm:$0xf]
    %v299 = vld [vmem:[#allocation2 + $0x128] sm:$0xf]
    %v300 = vld [vmem:[#allocation2 + $0x130] sm:$0xf]
    %v301 = vld [vmem:[#allocation2 + $0x138] sm:$0xf]
    %v302 = vld [vmem:[#allocation2 + $0x140] sm:$0xf]
    %v303 = vld [vmem:[#allocation2 + $0x148] sm:$0xf]
    %v304 = vld [vmem:[#allocation2 + $0x150] sm:$0xf]
    %v305 = vld [vmem:[#allocation2 + $0x158] sm:$0xf]
    %v306 = vld [vmem:[#allocation2 + $0x160] sm:$0xf]
    %v307 = vld [vmem:[#allocation2 + $0x168] sm:$0xf]
    %v308 = vld [vmem:[#allocation2 + $0x170] sm:$0xf]
    %v309 = vld [vmem:[#allocation2 + $0x178] sm:$0xf]
    %v310 = vld [vmem:[#allocation2 + $0x180] sm:$0xf]
    %v311 = vld [vmem:[#allocation2 + $0x188] sm:$0xf]
    %v312 = vld [vmem:[#allocation2 + $0x190] sm:$0xf]
    %v313 = vld [vmem:[#allocation2 + $0x198] sm:$0xf]
    %v314 = vld [vmem:[%s2 + $0x2] ss:$0 sm:$0xff]
    %v331 = vunpack.c.l.b16 %v298
    %v332 = vunpack.c.l.b16 %v299
    %v333 = vunpack.c.l.b16 %v300
    %v334 = vunpack.c.l.b16 %v301
    %v335 = vunpack.c.l.b16 %v302
    %v336 = vunpack.c.l.b16 %v303
    %v337 = vunpack.c.l.b16 %v304
    %v338 = vunpack.c.l.b16 %v305
    %v339 = vunpack.c.l.b16 %v306
    %v340 = vunpack.c.l.b16 %v307
    %v341 = vunpack.c.l.b16 %v308
    %v342 = vunpack.c.l.b16 %v309
    %v343 = vunpack.c.l.b16 %v310
    %v344 = vunpack.c.l.b16 %v311
    %v345 = vunpack.c.l.b16 %v312
    %v346 = vunpack.c.l.b16 %v313
    %v347 = vpack.c.b16 %v332, %v331
    %v348 = vpack.c.b16 %v334, %v333
    %v349 = vpack.c.b16 %v336, %v335
    %v350 = vpack.c.b16 %v338, %v337
    %v351 = vpack.c.b16 %v340, %v339
    %v352 = vpack.c.b16 %v342, %v341
    %v353 = vpack.c.b16 %v344, %v343
    %v354 = vpack.c.b16 %v346, %v345
    %363 = vmatprep.subr.bf16.mxu0 0
    %364 = vmatpush1.bf16.msra.mxu0 %v347
    %365 = vmatprep.subr.bf16.mxu0 0
    %366 = vmatpush1.bf16.msra.mxu0 %v348
    %367 = vmatprep.subr.bf16.mxu0 0
    %368 = vmatpush1.bf16.msra.mxu0 %v349
    %369 = vmatprep.subr.bf16.mxu0 0
    %370 = vmatpush1.bf16.msra.mxu0 %v350
    %371 = vmatprep.subr.bf16.mxu0 0
    %372 = vmatpush1.bf16.msra.mxu0 %v351
    %373 = vmatprep.subr.bf16.mxu0 0
    %374 = vmatpush1.bf16.msra.mxu0 %v352
    %375 = vmatprep.subr.bf16.mxu0 0
    %376 = vmatpush1.bf16.msra.mxu0 %v353
    %377 = vmatprep.subr.bf16.mxu0 0
    %378 = vmatpush1.bf16.msra.mxu0 %v354
    %379 = vmatprep.subr.bf16.mxu0 0
    %380 = vmatpush1.bf16.msra.mxu0 0
    %381 = vmatprep.subr.bf16.mxu0 0
    %382 = vmatpush1.bf16.msra.mxu0 0
    %383 = vmatprep.subr.bf16.mxu0 0
    %384 = vmatpush1.bf16.msra.mxu0 0
    %385 = vmatprep.subr.bf16.mxu0 0
    %386 = vmatpush1.bf16.msra.mxu0 0
    %387 = vmatprep.subr.bf16.mxu0 0
    %388 = vmatpush1.bf16.msra.mxu0 0
    %389 = vmatprep.subr.bf16.mxu0 0
    %390 = vmatpush1.bf16.msra.mxu0 0
    %391 = vmatprep.subr.bf16.mxu0 0
    %392 = vmatpush1.bf16.msra.mxu0 0
    %393 = vmatprep.subr.bf16.mxu0 0
    %394 = vmatpush1.bf16.msra.mxu0 0
    %395 = vmatprep.mubr.bf16.mxu0 0
    %396 = vmatmul.mubr.bf16.gmra.mrb[0].mxu0 %v297
    %v397 = vpop.f32.mrb[0].mxu0
    %v398 = vadd.f32 %v314, %v397
    %v399 = vpop.f32.mrb[0].mxu0
    %v400 = vpop.f32.mrb[0].mxu0
    %v401 = vadd.f32 %v314, %v400
    %v402 = vpop.f32.mrb[0].mxu0
    %403 = vdwg.mxu0
    %v404 = vmax.f32 %v398, 0.0
    %v405 = vmax.f32 %v401, 0.0
    %v406 = vpack.c.bf16 %v405, %v404
    %v407 = vld [vmem:[#allocation2 + $0x1a0] sm:$0xf]
    %v408 = vld [vmem:[#allocation2 + $0x1a8] sm:$0xf]
    %v409 = vld [vmem:[#allocation2 + $0x1b0] sm:$0xf]
    %v410 = vld [vmem:[#allocation2 + $0x1b8] sm:$0xf]
    %v411 = vld [vmem:[#allocation2 + $0x1c0] sm:$0xf]
    %v412 = vld [vmem:[#allocation2 + $0x1c8] sm:$0xf]
    %v413 = vld [vmem:[#allocation2 + $0x1d0] sm:$0xf]
    %v414 = vld [vmem:[#allocation2 + $0x1d8] sm:$0xf]
    %v415 = vld [vmem:[#allocation2 + $0x1e0] sm:$0xf]
    %v416 = vld [vmem:[#allocation2 + $0x1e8] sm:$0xf]
    %v417 = vld [vmem:[#allocation2 + $0x1f0] sm:$0xf]
    %v418 = vld [vmem:[#allocation2 + $0x1f8] sm:$0xf]
    %v419 = vld [vmem:[#allocation2 + $0x200] sm:$0xf]
    %v420 = vld [vmem:[#allocation2 + $0x208] sm:$0xf]
    %v421 = vld [vmem:[#allocation2 + $0x210] sm:$0xf]
    %v422 = vld [vmem:[#allocation2 + $0x218] sm:$0xf]
    %v423 = vld [vmem:[%s2 + $0x3] ss:$0 sm:$0xff]
    %v440 = vunpack.c.l.b16 %v407
    %v441 = vunpack.c.l.b16 %v408
    %v442 = vunpack.c.l.b16 %v409
    %v443 = vunpack.c.l.b16 %v410
    %v444 = vunpack.c.l.b16 %v411
    %v445 = vunpack.c.l.b16 %v412
    %v446 = vunpack.c.l.b16 %v413
    %v447 = vunpack.c.l.b16 %v414
    %v448 = vunpack.c.l.b16 %v415
    %v449 = vunpack.c.l.b16 %v416
    %v450 = vunpack.c.l.b16 %v417
    %v451 = vunpack.c.l.b16 %v418
    %v452 = vunpack.c.l.b16 %v419
    %v453 = vunpack.c.l.b16 %v420
    %v454 = vunpack.c.l.b16 %v421
    %v455 = vunpack.c.l.b16 %v422
    %v456 = vpack.c.b16 %v441, %v440
    %v457 = vpack.c.b16 %v443, %v442
    %v458 = vpack.c.b16 %v445, %v444
    %v459 = vpack.c.b16 %v447, %v446
    %v460 = vpack.c.b16 %v449, %v448
    %v461 = vpack.c.b16 %v451, %v450
    %v462 = vpack.c.b16 %v453, %v452
    %v463 = vpack.c.b16 %v455, %v454
    %472 = vmatprep.subr.bf16.mxu0 0
    %473 = vmatpush1.bf16.msra.mxu0 %v456
    %474 = vmatprep.subr.bf16.mxu0 0
    %475 = vmatpush1.bf16.msra.mxu0 %v457
    %476 = vmatprep.subr.bf16.mxu0 0
    %477 = vmatpush1.bf16.msra.mxu0 %v458
    %478 = vmatprep.subr.bf16.mxu0 0
    %479 = vmatpush1.bf16.msra.mxu0 %v459
    %480 = vmatprep.subr.bf16.mxu0 0
    %481 = vmatpush1.bf16.msra.mxu0 %v460
    %482 = vmatprep.subr.bf16.mxu0 0
    %483 = vmatpush1.bf16.msra.mxu0 %v461
    %484 = vmatprep.subr.bf16.mxu0 0
    %485 = vmatpush1.bf16.msra.mxu0 %v462
    %486 = vmatprep.subr.bf16.mxu0 0
    %487 = vmatpush1.bf16.msra.mxu0 %v463
    %488 = vmatprep.subr.bf16.mxu0 0
    %489 = vmatpush1.bf16.msra.mxu0 0
    %490 = vmatprep.subr.bf16.mxu0 0
    %491 = vmatpush1.bf16.msra.mxu0 0
    %492 = vmatprep.subr.bf16.mxu0 0
    %493 = vmatpush1.bf16.msra.mxu0 0
    %494 = vmatprep.subr.bf16.mxu0 0
    %495 = vmatpush1.bf16.msra.mxu0 0
    %496 = vmatprep.subr.bf16.mxu0 0
    %497 = vmatpush1.bf16.msra.mxu0 0
    %498 = vmatprep.subr.bf16.mxu0 0
    %499 = vmatpush1.bf16.msra.mxu0 0
    %500 = vmatprep.subr.bf16.mxu0 0
    %501 = vmatpush1.bf16.msra.mxu0 0
    %502 = vmatprep.subr.bf16.mxu0 0
    %503 = vmatpush1.bf16.msra.mxu0 0
    %504 = vmatprep.mubr.bf16.mxu0 0
    %505 = vmatmul.mubr.bf16.gmra.mrb[0].mxu0 %v406
    %v506 = vpop.f32.mrb[0].mxu0
    %v507 = vadd.f32 %v423, %v506
    %v508 = vpop.f32.mrb[0].mxu0
    %v509 = vpop.f32.mrb[0].mxu0
    %v510 = vadd.f32 %v423, %v509
    %v511 = vpop.f32.mrb[0].mxu0
    %512 = vdwg.mxu0
    %v513 = vmax.f32 %v507, 0.0
    %v514 = vmax.f32 %v510, 0.0
    %v515 = vld [vmem:[%s2 + $0x5] ss:$0 sm:$0xff]
    %v516 = vmul.f32 %v513, %v515
    %v517 = vmul.f32 %v514, %v515
    %518 = vadd.xlane.f32.xlu0 %v516
    %v519 = vpop.xlane.xlu0 %518
    %520 = vadd.xlane.f32.xlu0 %v517
    %v521 = vpop.xlane.xlu0 %520
    %v522 = vld [vmem:[%s2 + $0x4] ss:$0 sm:$0xff]
    %524 = vset.pattern.permute.xlu0 0
    %525 = vperm.xlu0 %524, %v522
    %v526 = vpop.permute.xlu0 %525
    %v528 = vadd.f32 %v519, %v526
    %v529 = vadd.f32 %v521, %v526
    %v532 = vlaneseq
    %v533 = vand.u32 %v532, 127
    %v534 = vlaneseq
    %v535 = vshrl.u32 %v534, 7
    %v536 = vsub.s32 %v533, %v535
    %v537 = vrot.slane %v528, %v536
    %v538 = vadd.s32 %v533, 4294967288
    %v539 = vlaneseq
    %v540 = vshrl.u32 %v539, 7
    %v541 = vsub.s32 %v538, %v540
    %v542 = vrot.slane %v529, %v541
    %vm543 = vcmask 130112
    %v544 = vsel %vm543, %v542, %v537
    %vm546 = vcmask 122880
    %547 = vst.msk [vmem:[%s3] sm:$0x1] %vm546, %v544
    // Predicated region
    $region18: #{mlp_forward.1} parent=1 // pred_check
      _
    $region19: #{mlp_forward.1} parent=1 // pred_check_branch
      %549 = sbr.rel (0) target = $region21
    $region20: #{mlp_forward.1} parent=1 // pred_region
      _
    $region21: #{mlp_forward.1} parent=1 // pred_fallthru
      _
    // Predicated region
    $region22: #{mlp_forward.1} parent=1 // pred_check
      _
    $region23: #{mlp_forward.1} parent=1 // pred_check_branch
      %551 = sbr.rel (0) target = $region25
    $region24: #{mlp_forward.1} parent=1 // pred_region
      _
    $region25: #{mlp_forward.1} parent=1 // pred_fallthru
      _
    %552 = vsyncpa [#allocation3], 1

</llo_original>
